<compile_context>
chip_gen: v6e
topology: v6e:2x2x1
jax: 0.10.0
libtpu: 0.0.40
codegen_flags: <defaults>
</compile_context>

<pallas_src>
import functools

import jax
import jax.numpy as jnp
from jax import lax
from jax.experimental import pallas as pl
from jax.experimental.pallas import tpu as pltpu


def _cdiv(a, b):
    return (a + b - 1) // b


def _round_up(x, m):
    return _cdiv(x, m) * m


def readout_ml_kernel(feat_ref, seg_ref, w1_ref, b1_ref, w2_ref, b2_ref,
                      m0_ref, glob_ref, *, n_atoms):
    # glob_ref's block index is constant across the grid -> resident accumulator.
    @pl.when(pl.program_id(0) == 0)
    def _():
        glob_ref[...] = jnp.zeros_like(glob_ref)

    tile_n = feat_ref.shape[0]

    # Fused first layer of both MLPs (bf16 MXU, f32 accumulate) + swish in f32.
    h = jnp.dot(feat_ref[...], w1_ref[...],
                preferred_element_type=jnp.float32) + b1_ref[...]        # (T, 2H) f32
    h = h * jax.nn.sigmoid(h)                                            # swish (EUP)

    # Fused (block-diagonal) second layer: col 0 = multipole 's', cols 1: = global MLP.
    out2 = jnp.dot(h.astype(w2_ref.dtype), w2_ref[...],
                   preferred_element_type=jnp.float32) + b2_ref[...]     # (T, 1+outdim)

    # Per-atom M0 store.  (T, 1) is a narrow (masked) store, but M0 is only a
    # few % of the kernel's HBM traffic and the vst slot co-issues with the MXU
    # pushes, so it stays off the critical path; it also avoids an in-kernel
    # (T, 2) -> (2, T) relayout whose lowering is shape-sensitive.
    m0_ref[...] = out2[:, 0:1]

    # SumPooling.  Mask rows past n_atoms (the ragged last tile is never padded
    # in HBM, so those VMEM rows hold stale bits that must not reach the pooled
    # sum — 0 * NaN would poison it).
    row0 = pl.program_id(0) * tile_n
    valid = (lax.broadcasted_iota(jnp.int32, (tile_n, 1), 0) + row0) < n_atoms
    p = jnp.where(valid, out2[:, 1:], 0.0)                               # (T, outdim)

    # TODO(synk): for very large graph counts, prefetch per-tile graph-id ranges
    # (PrefetchScalarGridSpec) and build the one-hot only over a local window;
    # the dense (G, T) compare is O(G*T) VPU work per tile.
    n_graphs = glob_ref.shape[0]
    seg = seg_ref[...]                                                   # (1, T) int32
    onehot = (lax.broadcasted_iota(jnp.int32, (n_graphs, tile_n), 0)
              == seg).astype(jnp.float32)                                # (G, T)
    # Standard MXU orientation (contract onehot lanes with p sublanes): no relayout.
    glob_ref[...] += jnp.dot(onehot, p, preferred_element_type=jnp.float32)


@functools.partial(jax.jit, static_argnames=("n_graphs", "tile_n"))
def readout_ml_forward(feat, seg_ids, params, *, n_graphs, tile_n=8192):
    """ReadOut_ML forward pass (m_max_order = 0).

    feat:    (N, C) atom features — ideally already bf16 from its producer so
             the cast below is a no-op and the kernel streams half the bytes.
    seg_ids: (N,) int graph id per atom (the only info SumPooling needs from g).
    Returns ({'M0': (N,) f32}, (n_graphs, outdim_global) f32).
    """
    n_atoms, c = feat.shape
    h = params["w1s"].shape[1]
    outdim_global = params["w2g"].shape[1]

    # bf16 activation/weight stream (f32 accumulation happens in-kernel).
    feat = feat.astype(jnp.bfloat16)

    # Balanced, 128-aligned atom tiles: large enough to amortize per-grid-step
    # overhead, balanced so padding waste stays under one 128-row group.
    # Sweep tile_n per generation (v7x with ~3.2 TB/s HBM: try 16k-32k).
    n_tiles = max(1, _cdiv(n_atoms, tile_n))
    tile_rows = _round_up(_cdiv(n_atoms, n_tiles), 128)
    grid = (_cdiv(n_atoms, tile_rows),)

    # Graph ids as a lane-major (1, N) row so the one-hot compare broadcasts
    # along sublanes with no relayout (O(N) int32, negligible traffic).
    seg = seg_ids.astype(jnp.int32).reshape(1, n_atoms)

    # Fuse the two MLPs (identical input): concat first layers, block-diagonal
    # second layer.  Weights are tiny and stay VMEM-resident across the grid.
    w1 = jnp.concatenate([params["w1s"], params["w1g"]], axis=1).astype(jnp.bfloat16)
    b1 = jnp.concatenate([params["b1s"], params["b1g"]], axis=1).astype(jnp.float32)
    w2 = jnp.zeros((2 * h, 1 + outdim_global), jnp.float32)
    w2 = w2.at[:h, 0:1].set(params["w2s"]).at[h:, 1:].set(params["w2g"])
    w2 = w2.astype(jnp.bfloat16)
    b2 = jnp.concatenate([params["b2s"], params["b2g"]], axis=1).astype(jnp.float32)

    full = lambda shape: pl.BlockSpec(shape, lambda i: (0, 0))

    m0, glob = pl.pallas_call(
        functools.partial(readout_ml_kernel, n_atoms=n_atoms),
        out_shape=(
            jax.ShapeDtypeStruct((n_atoms, 1), jnp.float32),
            jax.ShapeDtypeStruct((n_graphs, outdim_global), jnp.float32),
        ),
        grid=grid,
        in_specs=[
            pl.BlockSpec((tile_rows, c), lambda i: (i, 0)),              # feat tile (streamed)
            pl.BlockSpec((1, tile_rows), lambda i: (0, i)),              # graph-id tile
            full((c, 2 * h)),                                            # w1 (resident)
            full((1, 2 * h)),                                            # b1
            full((2 * h, 1 + outdim_global)),                            # w2
            full((1, 1 + outdim_global)),                                # b2
        ],
        out_specs=(
            pl.BlockSpec((tile_rows, 1), lambda i: (i, 0)),              # M0 per-atom
            pl.BlockSpec((n_graphs, outdim_global), lambda i: (0, 0)),   # pooled (resident)
        ),
        compiler_params=pltpu.CompilerParams(
            # The atom axis accumulates into the resident pooled block -> "arbitrary".
            # TODO(synk): on v7x (2 TCs) keep per-core partial pooled sums (leading
            # parallel grid axis + (2, G, outdim) output, summed in the wrapper) so
            # this axis can be split across cores.
            dimension_semantics=("arbitrary",),
        ),
    )(feat, seg, w1, b1, w2, b2)

    multipole_prop = {"M0": m0[:, 0]}     # matches s[:, 0] in the torch module
    return multipole_prop, glob


def init_params(key, n_atom_basis=32, n_hidden=None, n_layers=2, outdim_global=1):
    # schnetpack-style MLP with n_hidden=None, n_layers=2: [C, C//2, out]
    assert n_layers == 2 and n_hidden is None
    C = n_atom_basis
    H = C // 2
    ks = jax.random.split(key, 8)

    def dense(kw, fan_in, fan_out):
        scale = (2.0 / (fan_in + fan_out)) ** 0.5
        return scale * jax.random.normal(kw, (fan_in, fan_out), jnp.float32)

    return {
        # multipole 's' MLP (outdim = 1 for m_max_order = 0)
        "w1s": dense(ks[0], C, H), "b1s": 0.01 * jax.random.normal(ks[1], (1, H), jnp.float32),
        "w2s": dense(ks[2], H, 1), "b2s": 0.01 * jax.random.normal(ks[3], (1, 1), jnp.float32),
        # global MLP
        "w1g": dense(ks[4], C, H), "b1g": 0.01 * jax.random.normal(ks[5], (1, H), jnp.float32),
        "w2g": dense(ks[6], H, outdim_global),
        "b2g": 0.01 * jax.random.normal(ks[7], (1, outdim_global), jnp.float32),
    }


if __name__ == "__main__":
    key = jax.random.PRNGKey(0)
    k_feat, k_featv, k_par = jax.random.split(key, 3)

    N_ATOMS = 16          # total nodes across the batched graph (toy size)
    N_ATOM_BASIS = 32     # module default
    N_GRAPHS = 2          # two graphs of 8 atoms each

    feat_f32 = jax.random.normal(k_feat, (N_ATOMS, N_ATOM_BASIS), jnp.float32)
    feat = feat_f32.astype(jnp.bfloat16)   # producer-side bf16 (what the kernel streams)
    # feat_v is part of the module signature but unused for m_max_order=0 (default).
    feat_v = jax.random.normal(k_featv, (N_ATOMS, N_ATOM_BASIS, 3), jnp.float32)

    # DGL graph `g` -> per-atom graph ids (the only graph info SumPooling needs).
    seg_ids = jnp.concatenate([jnp.zeros((8,), jnp.int32), jnp.ones((8,), jnp.int32)])

    params = init_params(k_par, n_atom_basis=N_ATOM_BASIS)

    multipole_prop, global_prop = readout_ml_forward(
        feat, seg_ids, params, n_graphs=N_GRAPHS)
    jax.block_until_ready((multipole_prop, global_prop))

    assert multipole_prop["M0"].shape == (N_ATOMS,)
    assert global_prop.shape == (N_GRAPHS, 1)

    # Reference 1: same math with the kernel's bf16 rounding (tight tolerance).
    H = N_ATOM_BASIS // 2
    fb = feat.astype(jnp.float32)
    w1 = jnp.concatenate([params["w1s"], params["w1g"]], 1).astype(jnp.bfloat16).astype(jnp.float32)
    b1 = jnp.concatenate([params["b1s"], params["b1g"]], 1)
    w2 = jnp.zeros((2 * H, 2), jnp.float32)
    w2 = w2.at[:H, 0:1].set(params["w2s"]).at[H:, 1:].set(params["w2g"])
    w2 = w2.astype(jnp.bfloat16).astype(jnp.float32)
    b2 = jnp.concatenate([params["b2s"], params["b2g"]], 1)
    hh = fb @ w1 + b1
    hh = hh * jax.nn.sigmoid(hh)
    out2 = hh.astype(jnp.bfloat16).astype(jnp.float32) @ w2 + b2
    m0_ref = out2[:, 0]
    glob_ref = jax.ops.segment_sum(out2[:, 1:], seg_ids, num_segments=N_GRAPHS)
    assert jnp.allclose(multipole_prop["M0"], m0_ref, atol=1e-4, rtol=1e-4)
    assert jnp.allclose(global_prop, glob_ref, atol=1e-4, rtol=1e-4)

    # Reference 2: the original f32 module math (loose tolerance: the bf16
    # activation stream is the deliberate, documented bandwidth trade-off).
    hs = feat_f32 @ params["w1s"] + params["b1s"]; hs = hs * jax.nn.sigmoid(hs)
    s_ref = hs @ params["w2s"] + params["b2s"]
    hg = feat_f32 @ params["w1g"] + params["b1g"]; hg = hg * jax.nn.sigmoid(hg)
    p_ref = hg @ params["w2g"] + params["b2g"]
    g_ref = jax.ops.segment_sum(p_ref, seg_ids, num_segments=N_GRAPHS)
    assert jnp.allclose(multipole_prop["M0"], s_ref[:, 0], atol=5e-2)
    assert jnp.allclose(global_prop, g_ref, atol=2e-1)

    print("KERNEL_OK")
</pallas_src>

<mosaic_0001>
module attributes {stable_mosaic.version = 11 : i64} {
  func.func @readout_ml_kernel(%arg0: i32, %arg1: memref<128x32xbf16, #tpu.memory_space<vmem>>, %arg2: memref<1x128xi32, #tpu.memory_space<vmem>>, %arg3: memref<32x32xbf16, #tpu.memory_space<vmem>>, %arg4: memref<1x32xf32, #tpu.memory_space<vmem>>, %arg5: memref<32x2xbf16, #tpu.memory_space<vmem>>, %arg6: memref<1x2xf32, #tpu.memory_space<vmem>>, %arg7: memref<128x1xf32, #tpu.memory_space<vmem>>, %arg8: memref<2x1xf32, #tpu.memory_space<vmem>>) attributes {dimension_semantics = [#tpu.dimension_semantics<arbitrary>], iteration_bounds = array<i64: 1>, scalar_prefetch = 0 : i64, scratch_operands = 0 : i64, tpu.core_type = #tpu.core_type<tc>, window_params = [{transform_indices = @transform_0, window_bounds = array<i64: 128, 32>}, {transform_indices = @transform_1, window_bounds = array<i64: 1, 128>}, {pipeline_mode = #tpu.pipeline_mode<synchronous>, transform_indices = @transform_2, window_bounds = array<i64: 32, 32>}, {pipeline_mode = #tpu.pipeline_mode<synchronous>, transform_indices = @transform_3, window_bounds = array<i64: 1, 32>}, {pipeline_mode = #tpu.pipeline_mode<synchronous>, transform_indices = @transform_4, window_bounds = array<i64: 32, 2>}, {pipeline_mode = #tpu.pipeline_mode<synchronous>, transform_indices = @transform_5, window_bounds = array<i64: 1, 2>}, {transform_indices = @transform_6, window_bounds = array<i64: 128, 1>}, {pipeline_mode = #tpu.pipeline_mode<synchronous>, transform_indices = @transform_7, window_bounds = array<i64: 2, 1>}]} {
    %c0_i32 = arith.constant 0 : i32
    %0 = arith.cmpi eq, %arg0, %c0_i32 : i32
    %1 = arith.extui %0 : i1 to i32
    %c0_i32_0 = arith.constant 0 : i32
    %2 = arith.cmpi ne, %1, %c0_i32_0 : i32
    scf.if %2 {
      %cst_22 = arith.constant 0.000000e+00 : f32
      %42 = vector.broadcast %cst_22 : f32 to vector<2x1xf32>
      %c0_23 = arith.constant 0 : index
      %c0_24 = arith.constant 0 : index
      %43 = vector.load %arg8[%c0_23, %c0_24] : memref<2x1xf32, #tpu.memory_space<vmem>>, vector<2x1xf32>
      tpu.vector_store %arg8[%c0_23, %c0_24], %42 {strides = array<i32>} : memref<2x1xf32, #tpu.memory_space<vmem>>, vector<2x1xf32>,
    } else {
    }
    %c0 = arith.constant 0 : index
    %c0_1 = arith.constant 0 : index
    %3 = vector.load %arg1[%c0, %c0_1] : memref<128x32xbf16, #tpu.memory_space<vmem>>, vector<128x32xbf16>
    %c0_2 = arith.constant 0 : index
    %c0_3 = arith.constant 0 : index
    %4 = vector.load %arg3[%c0_2, %c0_3] : memref<32x32xbf16, #tpu.memory_space<vmem>>, vector<32x32xbf16>
    %cst = arith.constant dense<0.000000e+00> : vector<128x32xf32>
    %5 = tpu.matmul %3, %4, %cst {dimension_numbers = #tpu.dot_dimension_numbers<[1], [0], [0], [1], [0, 0, 1, 1], [], []>} : vector<128x32xbf16>, vector<32x32xbf16>, vector<128x32xf32> -> vector<128x32xf32>
    %c0_4 = arith.constant 0 : index
    %c0_5 = arith.constant 0 : index
    %6 = vector.load %arg4[%c0_4, %c0_5] : memref<1x32xf32, #tpu.memory_space<vmem>>, vector<1x32xf32>
    %7 = vector.broadcast %6 : vector<1x32xf32> to vector<128x32xf32>
    %8 = arith.addf %5, %7 : vector<128x32xf32>
    %9 = arith.negf %8 : vector<128x32xf32>
    %10 = math.exp %9 : vector<128x32xf32>
    %cst_6 = arith.constant 1.000000e+00 : f32
    %11 = vector.broadcast %cst_6 : f32 to vector<128x32xf32>
    %12 = arith.addf %11, %10 : vector<128x32xf32>
    %13 = arith.divf %11, %12 : vector<128x32xf32>
    %14 = arith.mulf %8, %13 : vector<128x32xf32>
    %15 = arith.truncf %14 : vector<128x32xf32> to vector<128x32xbf16>
    %c0_7 = arith.constant 0 : index
    %c0_8 = arith.constant 0 : index
    %16 = vector.load %arg5[%c0_7, %c0_8] : memref<32x2xbf16, #tpu.memory_space<vmem>>, vector<32x2xbf16>
    %cst_9 = arith.constant dense<0.000000e+00> : vector<128x2xf32>
    %17 = tpu.matmul %15, %16, %cst_9 {dimension_numbers = #tpu.dot_dimension_numbers<[1], [0], [0], [1], [0, 0, 1, 1], [], []>} : vector<128x32xbf16>, vector<32x2xbf16>, vector<128x2xf32> -> vector<128x2xf32>
    %c0_10 = arith.constant 0 : index
    %c0_11 = arith.constant 0 : index
    %18 = vector.load %arg6[%c0_10, %c0_11] : memref<1x2xf32, #tpu.memory_space<vmem>>, vector<1x2xf32>
    %19 = vector.broadcast %18 : vector<1x2xf32> to vector<128x2xf32>
    %20 = arith.addf %17, %19 : vector<128x2xf32>
    %21 = vector.extract_strided_slice %20 {offsets = [0, 0], sizes = [128, 1], strides = [1, 1]} : vector<128x2xf32> to vector<128x1xf32>
    %c0_12 = arith.constant 0 : index
    %c0_13 = arith.constant 0 : index
    %22 = vector.load %arg7[%c0_12, %c0_13] : memref<128x1xf32, #tpu.memory_space<vmem>>, vector<128x1xf32>
    tpu.vector_store %arg7[%c0_12, %c0_13], %21 {strides = array<i32>} : memref<128x1xf32, #tpu.memory_space<vmem>>, vector<128x1xf32>,
    %c128_i32 = arith.constant 128 : i32
    %23 = arith.muli %arg0, %c128_i32 : i32
    %24 = tpu.iota {dimensions = array<i32: 0>} : vector<128x1xi32>
    %25 = vector.broadcast %23 : i32 to vector<128x1xi32>
    %26 = arith.addi %24, %25 : vector<128x1xi32>
    %c16_i32 = arith.constant 16 : i32
    %27 = vector.broadcast %c16_i32 : i32 to vector<128x1xi32>
    %28 = arith.cmpi slt, %26, %27 : vector<128x1xi32>
    %29 = vector.extract_strided_slice %20 {offsets = [0, 1], sizes = [128, 1], strides = [1, 1]} : vector<128x2xf32> to vector<128x1xf32>
    %cst_14 = arith.constant 0.000000e+00 : f32
    %30 = vector.broadcast %cst_14 : f32 to vector<128x1xf32>
    %31 = arith.select %28, %29, %30 : vector<128x1xi1>, vector<128x1xf32>
    %c0_15 = arith.constant 0 : index
    %c0_16 = arith.constant 0 : index
    %32 = vector.load %arg2[%c0_15, %c0_16] : memref<1x128xi32, #tpu.memory_space<vmem>>, vector<1x128xi32>
    %33 = tpu.iota {dimensions = array<i32: 0>} : vector<2x128xi32>
    %34 = vector.broadcast %32 : vector<1x128xi32> to vector<2x128xi32>
    %35 = arith.cmpi eq, %33, %34 : vector<2x128xi32>
    %36 = arith.extui %35 : vector<2x128xi1> to vector<2x128xi32>
    %37 = arith.sitofp %36 : vector<2x128xi32> to vector<2x128xf32>
    %c0_17 = arith.constant 0 : index
    %c0_18 = arith.constant 0 : index
    %38 = vector.load %arg8[%c0_17, %c0_18] : memref<2x1xf32, #tpu.memory_space<vmem>>, vector<2x1xf32>
    %cst_19 = arith.constant dense<0.000000e+00> : vector<2x1xf32>
    %39 = tpu.matmul %37, %31, %cst_19 {dimension_numbers = #tpu.dot_dimension_numbers<[1], [0], [0], [1], [0, 0, 1, 1], [], []>} : vector<2x128xf32>, vector<128x1xf32>, vector<2x1xf32> -> vector<2x1xf32>
    %40 = arith.addf %38, %39 : vector<2x1xf32>
    %c0_20 = arith.constant 0 : index
    %c0_21 = arith.constant 0 : index
    %41 = vector.load %arg8[%c0_20, %c0_21] : memref<2x1xf32, #tpu.memory_space<vmem>>, vector<2x1xf32>
    tpu.vector_store %arg8[%c0_20, %c0_21], %40 {strides = array<i32>} : memref<2x1xf32, #tpu.memory_space<vmem>>, vector<2x1xf32>,
    return
  }
  func.func @transform_0(%arg0: i32) -> (i32, i32) {
    %c0_i32 = arith.constant 0 : i32
    %c0_i32_0 = arith.constant 0 : i32
    return %arg0, %c0_i32 : i32, i32
  }
  func.func @transform_1(%arg0: i32) -> (i32, i32) {
    %c0_i32 = arith.constant 0 : i32
    %c0_i32_0 = arith.constant 0 : i32
    return %c0_i32, %arg0 : i32, i32
  }
  func.func @transform_2(%arg0: i32) -> (i32, i32) {
    %c0_i32 = arith.constant 0 : i32
    %c0_i32_0 = arith.constant 0 : i32
    %c0_i32_1 = arith.constant 0 : i32
    return %c0_i32, %c0_i32_0 : i32, i32
  }
  func.func @transform_3(%arg0: i32) -> (i32, i32) {
    %c0_i32 = arith.constant 0 : i32
    %c0_i32_0 = arith.constant 0 : i32
    %c0_i32_1 = arith.constant 0 : i32
    return %c0_i32, %c0_i32_0 : i32, i32
  }
  func.func @transform_4(%arg0: i32) -> (i32, i32) {
    %c0_i32 = arith.constant 0 : i32
    %c0_i32_0 = arith.constant 0 : i32
    %c0_i32_1 = arith.constant 0 : i32
    return %c0_i32, %c0_i32_0 : i32, i32
  }
  func.func @transform_5(%arg0: i32) -> (i32, i32) {
    %c0_i32 = arith.constant 0 : i32
    %c0_i32_0 = arith.constant 0 : i32
    %c0_i32_1 = arith.constant 0 : i32
    return %c0_i32, %c0_i32_0 : i32, i32
  }
  func.func @transform_6(%arg0: i32) -> (i32, i32) {
    %c0_i32 = arith.constant 0 : i32
    %c0_i32_0 = arith.constant 0 : i32
    return %arg0, %c0_i32 : i32, i32
  }
  func.func @transform_7(%arg0: i32) -> (i32, i32) {
    %c0_i32 = arith.constant 0 : i32
    %c0_i32_0 = arith.constant 0 : i32
    %c0_i32_1 = arith.constant 0 : i32
    return %c0_i32, %c0_i32_0 : i32, i32
  }
}

</mosaic_0001>

<llo_original>
// kernel: readout_ml_forward.1
$region0: #{readout_ml_forward.1}
  #allocation0 [shape = 'u32[]', space=smem, size = 0x4, offset = 0x4, fixed_abs, tag = 'smem constant byte address 0x4 - core index']
  #allocation1 [shape = 'u32[144,128]{1,0:T(1,128)}', space=vmem, size = 0x12000, scoped, tag = 'internal scratch']
  %s0 = inlined_call_operand.vmem [shape: bf16[16,32], index: 0, kind: input, shape index: {}]
  %s1 = inlined_call_operand.vmem [shape: s32[1,16], index: 1, kind: input, shape index: {}]
  %s2 = inlined_call_operand.vmem [shape: bf16[32,32], index: 2, kind: input, shape index: {}]
  %s3 = inlined_call_operand.vmem [shape: f32[1,32], index: 3, kind: input, shape index: {}]
  %s4 = inlined_call_operand.vmem [shape: bf16[32,2], index: 4, kind: input, shape index: {}]
  %s5 = inlined_call_operand.vmem [shape: f32[1,2], index: 5, kind: input, shape index: {}]
  %s6 = inlined_call_operand.vmem [shape: f32[16,1], index: 6, kind: output, shape index: {0}]
  %s7 = inlined_call_operand.vmem [shape: f32[2,1], index: 7, kind: output, shape index: {1}]
  %8 = xla_tuple %s6, %s7
  %s9 = sld [smem:[#allocation0]]
  $region80: #{readout_ml_forward.1} parent=0
    _
  %s11 = ssub.s32 1, %s9
  %s12 = scalar_select 0, %s11, %s9
  $region1: #{readout_ml_forward.1} parent=0
    #allocation2 [shape = 'u8[65536]{0}', space=vmem, size = 0x10000, scoped, tag = 'output window, operand 0, single buffered']
    // Predicated region
    $region2: #{readout_ml_forward.1} parent=1 // pred_check
      _
    $region3: #{readout_ml_forward.1} parent=1 // pred_check_branch
      %14 = sbr.rel (0) target = $region5
    $region4: #{readout_ml_forward.1} parent=1 // pred_region
      _
    $region5: #{readout_ml_forward.1} parent=1 // pred_fallthru
      _
    // Predicated region
    $region6: #{readout_ml_forward.1} parent=1 // pred_check
      _
    $region7: #{readout_ml_forward.1} parent=1 // pred_check_branch
      %16 = sbr.rel (0) target = $region9
    $region8: #{readout_ml_forward.1} parent=1 // pred_region
      _
    $region9: #{readout_ml_forward.1} parent=1 // pred_fallthru
      _
    // Predicated region
    $region10: #{readout_ml_forward.1} parent=1 // pred_check
      _
    $region11: #{readout_ml_forward.1} parent=1 // pred_check_branch
      %18 = sbr.rel (0) target = $region13
    $region12: #{readout_ml_forward.1} parent=1 // pred_region
      _
    $region13: #{readout_ml_forward.1} parent=1 // pred_fallthru
      _
    // Predicated region
    $region14: #{readout_ml_forward.1} parent=1 // pred_check
      _
    $region15: #{readout_ml_forward.1} parent=1 // pred_check_branch
      %20 = sbr.rel (0) target = $region17
    $region16: #{readout_ml_forward.1} parent=1 // pred_region
      _
    $region17: #{readout_ml_forward.1} parent=1 // pred_fallthru
      _
    // Predicated region
    $region18: #{readout_ml_forward.1} parent=1 // pred_check
      _
    $region19: #{readout_ml_forward.1} parent=1 // pred_check_branch
      %22 = sbr.rel (0) target = $region21
    $region20: #{readout_ml_forward.1} parent=1 // pred_region
      _
    $region21: #{readout_ml_forward.1} parent=1 // pred_fallthru
      _
    // Predicated region
    $region22: #{readout_ml_forward.1} parent=1 // pred_check
      _
    $region23: #{readout_ml_forward.1} parent=1 // pred_check_branch
      %24 = sbr.rel (0) target = $region25
    $region24: #{readout_ml_forward.1} parent=1 // pred_region
      _
    $region25: #{readout_ml_forward.1} parent=1 // pred_fallthru
      _
    %p26 = scmp.eq.s32.totalorder 0, 0
    // Predicated region
    $region26: #{readout_ml_forward.1} parent=1 // pred_check
      %p27 = pneg %p26
    $region27: #{readout_ml_forward.1} parent=1 // pred_check_branch
      %29 = sbr.rel (%p27) target = $region29
    $region28: #{readout_ml_forward.1} parent=1 // pred_region
      %vm30 = vcmask 1024
      %31 = vst.msk [vmem:[%s7] sm:$0x3] %vm30, 0.0
    $region29: #{readout_ml_forward.1} parent=1 // pred_fallthru
      _
    %v32 = vld [vmem:[%s0] sm:$0xf]
    %v33 = vld [vmem:[%s0 + $0x4] sm:$0xf]
    %v34 = vld [vmem:[%s0 + $0x8] sm:$0xf]
    %v35 = vld [vmem:[%s0 + $0xc] sm:$0xf]
    %v36 = vld [vmem:[%s0 + $0x10] sm:$0xf]
    %v37 = vld [vmem:[%s0 + $0x14] sm:$0xf]
    %v38 = vld [vmem:[%s0 + $0x18] sm:$0xf]
    %v39 = vld [vmem:[%s0 + $0x1c] sm:$0xf]
    %v40 = vld [vmem:[%s0 + $0x20] sm:$0xf]
    %v41 = vld [vmem:[%s0 + $0x24] sm:$0xf]
    %v42 = vld [vmem:[%s0 + $0x28] sm:$0xf]
    %v43 = vld [vmem:[%s0 + $0x2c] sm:$0xf]
    %v44 = vld [vmem:[%s0 + $0x30] sm:$0xf]
    %v45 = vld [vmem:[%s0 + $0x34] sm:$0xf]
    %v46 = vld [vmem:[%s0 + $0x38] sm:$0xf]
    %v47 = vld [vmem:[%s0 + $0x3c] sm:$0xf]
    %v48 = vld [vmem:[%s2] sm:$0xf]
    %v49 = vld [vmem:[%s2 + $0x4] sm:$0xf]
    %v50 = vld [vmem:[%s2 + $0x8] sm:$0xf]
    %v51 = vld [vmem:[%s2 + $0xc] sm:$0xf]
    %v52 = vld [vmem:[%s3] sm:$0x1]
    %v54 = vlaneseq
    %v55 = vshrl.u32 %v54, 7
    %v56 = vsub.s32 0, %v55
    %v57 = vrot.slane %v52, %v56
    %v75 = vunpack.c.l.b16 %v32
    %v76 = vunpack.c.l.b16 %v33
    %v77 = vunpack.c.l.b16 %v34
    %v78 = vunpack.c.l.b16 %v35
    %v79 = vunpack.c.l.b16 %v36
    %v80 = vunpack.c.l.b16 %v37
    %v81 = vunpack.c.l.b16 %v38
    %v82 = vunpack.c.l.b16 %v39
    %v83 = vunpack.c.l.b16 %v40
    %v84 = vunpack.c.l.b16 %v41
    %v85 = vunpack.c.l.b16 %v42
    %v86 = vunpack.c.l.b16 %v43
    %v87 = vunpack.c.l.b16 %v44
    %v88 = vunpack.c.l.b16 %v45
    %v89 = vunpack.c.l.b16 %v46
    %v90 = vunpack.c.l.b16 %v47
    %v91 = vpack.c.b16 %v76, %v75
    %v92 = vpack.c.b16 %v78, %v77
    %v93 = vpack.c.b16 %v80, %v79
    %v94 = vpack.c.b16 %v82, %v81
    %v95 = vpack.c.b16 %v84, %v83
    %v96 = vpack.c.b16 %v86, %v85
    %v97 = vpack.c.b16 %v88, %v87
    %v98 = vpack.c.b16 %v90, %v89
    %v103 = vunpack.c.l.b16 %v48
    %v104 = vunpack.c.l.b16 %v49
    %v105 = vunpack.c.l.b16 %v50
    %v106 = vunpack.c.l.b16 %v51
    %v107 = vpack.c.b16 %v104, %v103
    %v108 = vpack.c.b16 %v106, %v105
    %vm111 = vcmask 261120
    %v113 = vsel %vm111, %v91, 0
    %v116 = vsel %vm111, %v92, 0
    %v119 = vsel %vm111, %v93, 0
    %v122 = vsel %vm111, %v94, 0
    %v125 = vsel %vm111, %v95, 0
    %v128 = vsel %vm111, %v96, 0
    %v131 = vsel %vm111, %v97, 0
    %v134 = vsel %vm111, %v98, 0
    %136 = vmatprep.subr.bf16.mxu0 0
    %137 = vmatpush1.bf16.msra.mxu0 0
    %138 = vmatprep.subr.bf16.mxu0 0
    %139 = vmatpush1.bf16.msra.mxu0 0
    %140 = vmatprep.subr.bf16.mxu0 0
    %141 = vmatpush1.bf16.msra.mxu0 0
    %142 = vmatprep.subr.bf16.mxu0 0
    %143 = vmatpush1.bf16.msra.mxu0 0
    %144 = vmatprep.subr.bf16.mxu0 0
    %145 = vmatpush1.bf16.msra.mxu0 0
    %146 = vmatprep.subr.bf16.mxu0 0
    %147 = vmatpush1.bf16.msra.mxu0 0
    %148 = vmatprep.subr.bf16.mxu0 0
    %149 = vmatpush1.bf16.msra.mxu0 %v108
    %150 = vmatprep.subr.bf16.mxu0 0
    %151 = vmatpush1.bf16.msra.mxu0 %v107
    %152 = vmatprep.subr.bf16.mxu0 0
    %153 = vmatpush2.bf16.msra.mxu0 0
    %154 = vmatprep.subr.bf16.mxu0 0
    %155 = vmatpush2.bf16.msra.mxu0 0
    %156 = vmatprep.subr.bf16.mxu0 0
    %157 = vmatpush2.bf16.msra.mxu0 0
    %158 = vmatprep.subr.bf16.mxu0 0
    %159 = vmatpush2.bf16.msra.mxu0 0
    %160 = vmatprep.subr.bf16.mxu0 0
    %161 = vmatpush2.bf16.msra.mxu0 0
    %162 = vmatprep.subr.bf16.mxu0 0
    %163 = vmatpush2.bf16.msra.mxu0 0
    %164 = vmatprep.subr.bf16.mxu0 0
    %165 = vmatpush2.bf16.msra.mxu0 0
    %166 = vmatprep.subr.bf16.mxu0 0
    %167 = vmatpush2.bf16.msra.mxu0 0
    %168 = vmatprep.mubr.bf16.mxu0 0
    %169 = vmatmul.mubr.bf16.gmra.mxu0 %v113
    %v170 = vpop.f32.mrf.mxu0
    %v171 = vadd.f32 %v57, %v170
    %v172 = vpop.f32.mrf.mxu0
    %v173 = vpop.f32.mrf.mxu0
    %v174 = vadd.f32 %v57, %v173
    %v175 = vpop.f32.mrf.mxu0
    %176 = vmatprep.mubr.bf16.mxu0 0
    %177 = vmatmul.mubr.bf16.gmra.mxu0 %v116
    %v178 = vpop.f32.mrf.mxu0
    %v179 = vadd.f32 %v57, %v178
    %v180 = vpop.f32.mrf.mxu0
    %v181 = vpop.f32.mrf.mxu0
    %v182 = vadd.f32 %v57, %v181
    %v183 = vpop.f32.mrf.mxu0
    %184 = vmatprep.mubr.bf16.mxu0 0
    %185 = vmatmul.mubr.bf16.gmra.mxu0 %v119
    %v186 = vpop.f32.mrf.mxu0
    %v187 = vadd.f32 %v57, %v186
    %v188 = vpop.f32.mrf.mxu0
    %v189 = vpop.f32.mrf.mxu0
    %v190 = vadd.f32 %v57, %v189
    %v191 = vpop.f32.mrf.mxu0
    %192 = vmatprep.mubr.bf16.mxu0 0
    %193 = vmatmul.mubr.bf16.gmra.mxu0 %v122
    %v194 = vpop.f32.mrf.mxu0
    %v195 = vadd.f32 %v57, %v194
    %v196 = vpop.f32.mrf.mxu0
    %v197 = vpop.f32.mrf.mxu0
    %v198 = vadd.f32 %v57, %v197
    %v199 = vpop.f32.mrf.mxu0
    %200 = vmatprep.mubr.bf16.mxu0 0
    %201 = vmatmul.mubr.bf16.gmra.mxu0 %v125
    %v202 = vpop.f32.mrf.mxu0
    %v203 = vadd.f32 %v57, %v202
    %v204 = vpop.f32.mrf.mxu0
    %v205 = vpop.f32.mrf.mxu0
    %v206 = vadd.f32 %v57, %v205
    %v207 = vpop.f32.mrf.mxu0
    %208 = vmatprep.mubr.bf16.mxu0 0
    %209 = vmatmul.mubr.bf16.gmra.mxu0 %v128
    %v210 = vpop.f32.mrf.mxu0
    %v211 = vadd.f32 %v57, %v210
    %v212 = vpop.f32.mrf.mxu0
    %v213 = vpop.f32.mrf.mxu0
    %v214 = vadd.f32 %v57, %v213
    %v215 = vpop.f32.mrf.mxu0
    %216 = vmatprep.mubr.bf16.mxu0 0
    %217 = vmatmul.mubr.bf16.gmra.mxu0 %v131
    %v218 = vpop.f32.mrf.mxu0
    %v219 = vadd.f32 %v57, %v218
    %v220 = vpop.f32.mrf.mxu0
    %v221 = vpop.f32.mrf.mxu0
    %v222 = vadd.f32 %v57, %v221
    %v223 = vpop.f32.mrf.mxu0
    %224 = vmatprep.mubr.bf16.mxu0 0
    %225 = vmatmul.mubr.bf16.gmra.mxu0 %v134
    %v226 = vpop.f32.mrf.mxu0
    %v227 = vadd.f32 %v57, %v226
    %v228 = vpop.f32.mrf.mxu0
    %v229 = vpop.f32.mrf.mxu0
    %v230 = vadd.f32 %v57, %v229
    %v231 = vpop.f32.mrf.mxu0
    %232 = vdwg.mxu0
    %v233 = vxor.u32 %v171, 2147483648
    %v234 = vxor.u32 %v174, 2147483648
    %v235 = vxor.u32 %v179, 2147483648
    %v236 = vxor.u32 %v182, 2147483648
    %v237 = vxor.u32 %v187, 2147483648
    %v238 = vxor.u32 %v190, 2147483648
    %v239 = vxor.u32 %v195, 2147483648
    %v240 = vxor.u32 %v198, 2147483648
    %v241 = vxor.u32 %v203, 2147483648
    %v242 = vxor.u32 %v206, 2147483648
    %v243 = vxor.u32 %v211, 2147483648
    %v244 = vxor.u32 %v214, 2147483648
    %v245 = vxor.u32 %v219, 2147483648
    %v246 = vxor.u32 %v222, 2147483648
    %v247 = vxor.u32 %v227, 2147483648
    %v248 = vxor.u32 %v230, 2147483648
    %v249 = vmul.f32 %v233, 1.442695
    %v250 = vpow.pop %v249
    %v251 = vmul.f32 %v234, 1.442695
    %v252 = vpow.pop %v251
    %v253 = vmul.f32 %v235, 1.442695
    %v254 = vpow.pop %v253
    %v255 = vmul.f32 %v236, 1.442695
    %v256 = vpow.pop %v255
    %v257 = vmul.f32 %v237, 1.442695
    %v258 = vpow.pop %v257
    %v259 = vmul.f32 %v238, 1.442695
    %v260 = vpow.pop %v259
    %v261 = vmul.f32 %v239, 1.442695
    %v262 = vpow.pop %v261
    %v263 = vmul.f32 %v240, 1.442695
    %v264 = vpow.pop %v263
    %v265 = vmul.f32 %v241, 1.442695
    %v266 = vpow.pop %v265
    %v267 = vmul.f32 %v242, 1.442695
    %v268 = vpow.pop %v267
    %v269 = vmul.f32 %v243, 1.442695
    %v270 = vpow.pop %v269
    %v271 = vmul.f32 %v244, 1.442695
    %v272 = vpow.pop %v271
    %v273 = vmul.f32 %v245, 1.442695
    %v274 = vpow.pop %v273
    %v275 = vmul.f32 %v246, 1.442695
    %v276 = vpow.pop %v275
    %v277 = vmul.f32 %v247, 1.442695
    %v278 = vpow.pop %v277
    %v279 = vmul.f32 %v248, 1.442695
    %v280 = vpow.pop %v279
    %v281 = vadd.f32 %v250, 1.0
    %v282 = vadd.f32 %v252, 1.0
    %v283 = vadd.f32 %v254, 1.0
    %v284 = vadd.f32 %v256, 1.0
    %v285 = vadd.f32 %v258, 1.0
    %v286 = vadd.f32 %v260, 1.0
    %v287 = vadd.f32 %v262, 1.0
    %v288 = vadd.f32 %v264, 1.0
    %v289 = vadd.f32 %v266, 1.0
    %v290 = vadd.f32 %v268, 1.0
    %v291 = vadd.f32 %v270, 1.0
    %v292 = vadd.f32 %v272, 1.0
    %v293 = vadd.f32 %v274, 1.0
    %v294 = vadd.f32 %v276, 1.0
    %v295 = vadd.f32 %v278, 1.0
    %v296 = vadd.f32 %v280, 1.0
    %v297 = vrcp.pop %v281
    %v298 = vmul.f32 1.0, %v297
    %v299 = vrcp.pop %v282
    %v300 = vmul.f32 1.0, %v299
    %v301 = vrcp.pop %v283
    %v302 = vmul.f32 1.0, %v301
    %v303 = vrcp.pop %v284
    %v304 = vmul.f32 1.0, %v303
    %v305 = vrcp.pop %v285
    %v306 = vmul.f32 1.0, %v305
    %v307 = vrcp.pop %v286
    %v308 = vmul.f32 1.0, %v307
    %v309 = vrcp.pop %v287
    %v310 = vmul.f32 1.0, %v309
    %v311 = vrcp.pop %v288
    %v312 = vmul.f32 1.0, %v311
    %v313 = vrcp.pop %v289
    %v314 = vmul.f32 1.0, %v313
    %v315 = vrcp.pop %v290
    %v316 = vmul.f32 1.0, %v315
    %v317 = vrcp.pop %v291
    %v318 = vmul.f32 1.0, %v317
    %v319 = vrcp.pop %v292
    %v320 = vmul.f32 1.0, %v319
    %v321 = vrcp.pop %v293
    %v322 = vmul.f32 1.0, %v321
    %v323 = vrcp.pop %v294
    %v324 = vmul.f32 1.0, %v323
    %v325 = vrcp.pop %v295
    %v326 = vmul.f32 1.0, %v325
    %v327 = vrcp.pop %v296
    %v328 = vmul.f32 1.0, %v327
    %v329 = vmul.f32 %v171, %v298
    %v330 = vmul.f32 %v174, %v300
    %v331 = vmul.f32 %v179, %v302
    %v332 = vmul.f32 %v182, %v304
    %v333 = vmul.f32 %v187, %v306
    %v334 = vmul.f32 %v190, %v308
    %v335 = vmul.f32 %v195, %v310
    %v336 = vmul.f32 %v198, %v312
    %v337 = vmul.f32 %v203, %v314
    %v338 = vmul.f32 %v206, %v316
    %v339 = vmul.f32 %v211, %v318
    %v340 = vmul.f32 %v214, %v320
    %v341 = vmul.f32 %v219, %v322
    %v342 = vmul.f32 %v222, %v324
    %v343 = vmul.f32 %v227, %v326
    %v344 = vmul.f32 %v230, %v328
    %v345 = vpack.c.bf16 %v330, %v329
    %v346 = vpack.c.bf16 %v332, %v331
    %v347 = vpack.c.bf16 %v334, %v333
    %v348 = vpack.c.bf16 %v336, %v335
    %v349 = vpack.c.bf16 %v338, %v337
    %v350 = vpack.c.bf16 %v340, %v339
    %v351 = vpack.c.bf16 %v342, %v341
    %v352 = vpack.c.bf16 %v344, %v343
    %v353 = vld [vmem:[%s4] sm:$0xf]
    %v354 = vld [vmem:[%s4 + $0x4] sm:$0xf]
    %v355 = vld [vmem:[%s4 + $0x8] sm:$0xf]
    %v356 = vld [vmem:[%s4 + $0xc] sm:$0xf]
    %v357 = vld [vmem:[%s5] sm:$0x1]
    %v359 = vlaneseq
    %v360 = vshrl.u32 %v359, 7
    %v361 = vsub.s32 0, %v360
    %v362 = vrot.slane %v357, %v361
    %v368 = vunpack.c.l.b16 %v353
    %v369 = vunpack.c.l.b16 %v354
    %v370 = vunpack.c.l.b16 %v355
    %v371 = vunpack.c.l.b16 %v356
    %v372 = vpack.c.b16 %v369, %v368
    %v373 = vpack.c.b16 %v371, %v370
    %v377 = vsel %vm111, %v345, 0
    %v380 = vsel %vm111, %v346, 0
    %v383 = vsel %vm111, %v347, 0
    %v386 = vsel %vm111, %v348, 0
    %v389 = vsel %vm111, %v349, 0
    %v392 = vsel %vm111, %v350, 0
    %v395 = vsel %vm111, %v351, 0
    %v398 = vsel %vm111, %v352, 0
    %400 = vmatprep.subr.bf16.mxu0 0
    %401 = vmatpush1.bf16.msra.mxu0 0
    %402 = vmatprep.subr.bf16.mxu0 0
    %403 = vmatpush1.bf16.msra.mxu0 0
    %404 = vmatprep.subr.bf16.mxu0 0
    %405 = vmatpush1.bf16.msra.mxu0 0
    %406 = vmatprep.subr.bf16.mxu0 0
    %407 = vmatpush1.bf16.msra.mxu0 0
    %408 = vmatprep.subr.bf16.mxu0 0
    %409 = vmatpush1.bf16.msra.mxu0 0
    %410 = vmatprep.subr.bf16.mxu0 0
    %411 = vmatpush1.bf16.msra.mxu0 0
    %412 = vmatprep.subr.bf16.mxu0 0
    %413 = vmatpush1.bf16.msra.mxu0 %v373
    %414 = vmatprep.subr.bf16.mxu0 0
    %415 = vmatpush1.bf16.msra.mxu0 %v372
    %416 = vmatprep.subr.bf16.mxu0 0
    %417 = vmatpush2.bf16.msra.mxu0 0
    %418 = vmatprep.subr.bf16.mxu0 0
    %419 = vmatpush2.bf16.msra.mxu0 0
    %420 = vmatprep.subr.bf16.mxu0 0
    %421 = vmatpush2.bf16.msra.mxu0 0
    %422 = vmatprep.subr.bf16.mxu0 0
    %423 = vmatpush2.bf16.msra.mxu0 0
    %424 = vmatprep.subr.bf16.mxu0 0
    %425 = vmatpush2.bf16.msra.mxu0 0
    %426 = vmatprep.subr.bf16.mxu0 0
    %427 = vmatpush2.bf16.msra.mxu0 0
    %428 = vmatprep.subr.bf16.mxu0 0
    %429 = vmatpush2.bf16.msra.mxu0 0
    %430 = vmatprep.subr.bf16.mxu0 0
    %431 = vmatpush2.bf16.msra.mxu0 0
    %432 = vmatprep.mubr.bf16.mxu0 0
    %433 = vmatmul.mubr.bf16.gmra.mxu0 %v377
    %v434 = vpop.f32.mrf.mxu0
    %v435 = vadd.f32 %v362, %v434
    %v436 = vpop.f32.mrf.mxu0
    %v437 = vpop.f32.mrf.mxu0
    %v438 = vadd.f32 %v362, %v437
    %v439 = vpop.f32.mrf.mxu0
    %440 = vmatprep.mubr.bf16.mxu0 0
    %441 = vmatmul.mubr.bf16.gmra.mxu0 %v380
    %v442 = vpop.f32.mrf.mxu0
    %v443 = vadd.f32 %v362, %v442
    %v444 = vpop.f32.mrf.mxu0
    %v445 = vpop.f32.mrf.mxu0
    %v446 = vadd.f32 %v362, %v445
    %v447 = vpop.f32.mrf.mxu0
    %448 = vmatprep.mubr.bf16.mxu0 0
    %449 = vmatmul.mubr.bf16.gmra.mxu0 %v383
    %v450 = vpop.f32.mrf.mxu0
    %v451 = vadd.f32 %v362, %v450
    %v452 = vpop.f32.mrf.mxu0
    %v453 = vpop.f32.mrf.mxu0
    %v454 = vadd.f32 %v362, %v453
    %v455 = vpop.f32.mrf.mxu0
    %456 = vmatprep.mubr.bf16.mxu0 0
    %457 = vmatmul.mubr.bf16.gmra.mxu0 %v386
    %v458 = vpop.f32.mrf.mxu0
    %v459 = vadd.f32 %v362, %v458
    %v460 = vpop.f32.mrf.mxu0
    %v461 = vpop.f32.mrf.mxu0
    %v462 = vadd.f32 %v362, %v461
    %v463 = vpop.f32.mrf.mxu0
    %464 = vmatprep.mubr.bf16.mxu0 0
    %465 = vmatmul.mubr.bf16.gmra.mxu0 %v389
    %v466 = vpop.f32.mrf.mxu0
    %v467 = vadd.f32 %v362, %v466
    %v468 = vpop.f32.mrf.mxu0
    %v469 = vpop.f32.mrf.mxu0
    %v470 = vadd.f32 %v362, %v469
    %v471 = vpop.f32.mrf.mxu0
    %472 = vmatprep.mubr.bf16.mxu0 0
    %473 = vmatmul.mubr.bf16.gmra.mxu0 %v392
    %v474 = vpop.f32.mrf.mxu0
    %v475 = vadd.f32 %v362, %v474
    %v476 = vpop.f32.mrf.mxu0
    %v477 = vpop.f32.mrf.mxu0
    %v478 = vadd.f32 %v362, %v477
    %v479 = vpop.f32.mrf.mxu0
    %480 = vmatprep.mubr.bf16.mxu0 0
    %481 = vmatmul.mubr.bf16.gmra.mxu0 %v395
    %v482 = vpop.f32.mrf.mxu0
    %v483 = vadd.f32 %v362, %v482
    %v484 = vpop.f32.mrf.mxu0
    %v485 = vpop.f32.mrf.mxu0
    %v486 = vadd.f32 %v362, %v485
    %v487 = vpop.f32.mrf.mxu0
    %488 = vmatprep.mubr.bf16.mxu0 0
    %489 = vmatmul.mubr.bf16.gmra.mxu0 %v398
    %v490 = vpop.f32.mrf.mxu0
    %v491 = vadd.f32 %v362, %v490
    %v492 = vpop.f32.mrf.mxu0
    %v493 = vpop.f32.mrf.mxu0
    %v494 = vadd.f32 %v362, %v493
    %v495 = vpop.f32.mrf.mxu0
    %496 = vdwg.mxu0
    %vm497 = vcmask 7168
    %498 = vst.msk [vmem:[#allocation2] sm:$0xff] %vm497, %v435
    %499 = vst.msk [vmem:[#allocation2 + $0x8] sm:$0xff] %vm497, %v438
    %500 = vst.msk [vmem:[#allocation2 + $0x10] sm:$0xff] %vm497, %v443
    %501 = vst.msk [vmem:[#allocation2 + $0x18] sm:$0xff] %vm497, %v446
    %502 = vst.msk [vmem:[#allocation2 + $0x20] sm:$0xff] %vm497, %v451
    %503 = vst.msk [vmem:[#allocation2 + $0x28] sm:$0xff] %vm497, %v454
    %504 = vst.msk [vmem:[#allocation2 + $0x30] sm:$0xff] %vm497, %v459
    %505 = vst.msk [vmem:[#allocation2 + $0x38] sm:$0xff] %vm497, %v462
    %506 = vst.msk [vmem:[#allocation2 + $0x40] sm:$0xff] %vm497, %v467
    %507 = vst.msk [vmem:[#allocation2 + $0x48] sm:$0xff] %vm497, %v470
    %508 = vst.msk [vmem:[#allocation2 + $0x50] sm:$0xff] %vm497, %v475
    %509 = vst.msk [vmem:[#allocation2 + $0x58] sm:$0xff] %vm497, %v478
    %510 = vst.msk [vmem:[#allocation2 + $0x60] sm:$0xff] %vm497, %v483
    %511 = vst.msk [vmem:[#allocation2 + $0x68] sm:$0xff] %vm497, %v486
    %512 = vst.msk [vmem:[#allocation2 + $0x70] sm:$0xff] %vm497, %v491
    %513 = vst.msk [vmem:[#allocation2 + $0x78] sm:$0xff] %vm497, %v494
    %s514 = smul.u32 0, 128
    %v515 = vlaneseq
    %v516 = vshrl.u32 %v515, 7
    %v517 = vadd.s32 %v516, 8
    %v518 = vadd.s32 %v516, 16
    %v519 = vadd.s32 %v516, 24
    %v520 = vadd.s32 %v516, 32
    %v521 = vadd.s32 %v516, 40
    %v522 = vadd.s32 %v516, 48
    %v523 = vadd.s32 %v516, 56
    %v524 = vadd.s32 %v516, 64
    %v525 = vadd.s32 %v516, 72
    %v526 = vadd.s32 %v516, 80
    %v527 = vadd.s32 %v516, 88
    %v528 = vadd.s32 %v516, 96
    %v529 = vadd.s32 %v516, 104
    %v530 = vadd.s32 %v516, 112
    %v531 = vadd.s32 %v516, 120
    %v532 = vstv %s514
    %v533 = vadd.s32 %v516, %v532
    %v534 = vadd.s32 %v517, %v532
    %v535 = vadd.s32 %v518, %v532
    %v536 = vadd.s32 %v519, %v532
    %v537 = vadd.s32 %v520, %v532
    %v538 = vadd.s32 %v521, %v532
    %v539 = vadd.s32 %v522, %v532
    %v540 = vadd.s32 %v523, %v532
    %v541 = vadd.s32 %v524, %v532
    %v542 = vadd.s32 %v525, %v532
    %v543 = vadd.s32 %v526, %v532
    %v544 = vadd.s32 %v527, %v532
    %v545 = vadd.s32 %v528, %v532
    %v546 = vadd.s32 %v529, %v532
    %v547 = vadd.s32 %v530, %v532
    %v548 = vadd.s32 %v531, %v532
    %vm549 = vcmp.lt.s32.totalorder %v533, 16
    %vm550 = vcmp.lt.s32.totalorder %v534, 16
    %vm551 = vcmp.lt.s32.totalorder %v535, 16
    %vm552 = vcmp.lt.s32.totalorder %v536, 16
    %vm553 = vcmp.lt.s32.totalorder %v537, 16
    %vm554 = vcmp.lt.s32.totalorder %v538, 16
    %vm555 = vcmp.lt.s32.totalorder %v539, 16
    %vm556 = vcmp.lt.s32.totalorder %v540, 16
    %vm557 = vcmp.lt.s32.totalorder %v541, 16
    %vm558 = vcmp.lt.s32.totalorder %v542, 16
    %vm559 = vcmp.lt.s32.totalorder %v543, 16
    %vm560 = vcmp.lt.s32.totalorder %v544, 16
    %vm561 = vcmp.lt.s32.totalorder %v545, 16
    %vm562 = vcmp.lt.s32.totalorder %v546, 16
    %vm563 = vcmp.lt.s32.totalorder %v547, 16
    %vm564 = vcmp.lt.s32.totalorder %v548, 16
    %v565 = vsel %vm549, %v435, 0.0
    %v566 = vsel %vm550, %v438, 0.0
    %v567 = vsel %vm551, %v443, 0.0
    %v568 = vsel %vm552, %v446, 0.0
    %v569 = vsel %vm553, %v451, 0.0
    %v570 = vsel %vm554, %v454, 0.0
    %v571 = vsel %vm555, %v459, 0.0
    %v572 = vsel %vm556, %v462, 0.0
    %v573 = vsel %vm557, %v467, 0.0
    %v574 = vsel %vm558, %v470, 0.0
    %v575 = vsel %vm559, %v475, 0.0
    %v576 = vsel %vm560, %v478, 0.0
    %v577 = vsel %vm561, %v483, 0.0
    %v578 = vsel %vm562, %v486, 0.0
    %v579 = vsel %vm563, %v491, 0.0
    %v580 = vsel %vm564, %v494, 0.0
    %v581 = vld [vmem:[%s1] sm:$0x1]
    %v582 = vlaneseq
    %v583 = vshrl.u32 %v582, 7
    %v584 = vsub.s32 0, %v583
    %v585 = vrot.slane %v581, %v584
    %vm586 = vcmp.eq.s32.totalorder %v516, %v585
    %v587 = vsel %vm586, 1, 0
    %v588 = vcvt.s32.f32 %v587
    %v589 = vld [vmem:[%s7] sm:$0x3]
    %606 = vrot.lane.b32.xlu0 %v565, 127
    %v607 = vpop.permute.xlu0 %606
    %608 = vrot.lane.b32.xlu0 %v566, 127
    %v609 = vpop.permute.xlu0 %608
    %610 = vrot.lane.b32.xlu0 %v567, 127
    %v611 = vpop.permute.xlu0 %610
    %612 = vrot.lane.b32.xlu0 %v568, 127
    %v613 = vpop.permute.xlu0 %612
    %614 = vrot.lane.b32.xlu0 %v569, 127
    %v615 = vpop.permute.xlu0 %614
    %616 = vrot.lane.b32.xlu0 %v570, 127
    %v617 = vpop.permute.xlu0 %616
    %618 = vrot.lane.b32.xlu0 %v571, 127
    %v619 = vpop.permute.xlu0 %618
    %620 = vrot.lane.b32.xlu0 %v572, 127
    %v621 = vpop.permute.xlu0 %620
    %622 = vrot.lane.b32.xlu0 %v573, 127
    %v623 = vpop.permute.xlu0 %622
    %624 = vrot.lane.b32.xlu0 %v574, 127
    %v625 = vpop.permute.xlu0 %624
    %626 = vrot.lane.b32.xlu0 %v575, 127
    %v627 = vpop.permute.xlu0 %626
    %628 = vrot.lane.b32.xlu0 %v576, 127
    %v629 = vpop.permute.xlu0 %628
    %630 = vrot.lane.b32.xlu0 %v577, 127
    %v631 = vpop.permute.xlu0 %630
    %632 = vrot.lane.b32.xlu0 %v578, 127
    %v633 = vpop.permute.xlu0 %632
    %634 = vrot.lane.b32.xlu0 %v579, 127
    %v635 = vpop.permute.xlu0 %634
    %636 = vrot.lane.b32.xlu0 %v580, 127
    %v637 = vpop.permute.xlu0 %636
    %654 = vmatprep.subr.mxu0 0.0
    %655 = vmatpush1.msra.mxu0 %v637
    %656 = vmatprep.subr.mxu0 0.0
    %657 = vmatpush1.msra.mxu0 %v635
    %658 = vmatprep.subr.mxu0 0.0
    %659 = vmatpush1.msra.mxu0 %v633
    %660 = vmatprep.subr.mxu0 0.0
    %661 = vmatpush1.msra.mxu0 %v631
    %662 = vmatprep.subr.mxu0 0.0
    %663 = vmatpush1.msra.mxu0 %v629
    %664 = vmatprep.subr.mxu0 0.0
    %665 = vmatpush1.msra.mxu0 %v627
    %666 = vmatprep.subr.mxu0 0.0
    %667 = vmatpush1.msra.mxu0 %v625
    %668 = vmatprep.subr.mxu0 0.0
    %669 = vmatpush1.msra.mxu0 %v623
    %670 = vmatprep.subr.mxu0 0.0
    %671 = vmatpush1.msra.mxu0 %v621
    %672 = vmatprep.subr.mxu0 0.0
    %673 = vmatpush1.msra.mxu0 %v619
    %674 = vmatprep.subr.mxu0 0.0
    %675 = vmatpush1.msra.mxu0 %v617
    %676 = vmatprep.subr.mxu0 0.0
    %677 = vmatpush1.msra.mxu0 %v615
    %678 = vmatprep.subr.mxu0 0.0
    %679 = vmatpush1.msra.mxu0 %v613
    %680 = vmatprep.subr.mxu0 0.0
    %681 = vmatpush1.msra.mxu0 %v611
    %682 = vmatprep.subr.mxu0 0.0
    %683 = vmatpush1.msra.mxu0 %v609
    %684 = vmatprep.subr.mxu0 0.0
    %685 = vmatpush1.msra.mxu0 %v607
    %686 = vmatprep.subr.mxu0 0.0
    %687 = vmatpush2.msra.mxu0 0.0
    %688 = vmatprep.subr.mxu0 0.0
    %689 = vmatpush2.msra.mxu0 0.0
    %690 = vmatprep.subr.mxu0 0.0
    %691 = vmatpush2.msra.mxu0 0.0
    %692 = vmatprep.subr.mxu0 0.0
    %693 = vmatpush2.msra.mxu0 0.0
    %694 = vmatprep.subr.mxu0 0.0
    %695 = vmatpush2.msra.mxu0 0.0
    %696 = vmatprep.subr.mxu0 0.0
    %697 = vmatpush2.msra.mxu0 0.0
    %698 = vmatprep.subr.mxu0 0.0
    %699 = vmatpush2.msra.mxu0 0.0
    %700 = vmatprep.subr.mxu0 0.0
    %701 = vmatpush2.msra.mxu0 0.0
    %702 = vmatprep.subr.mxu0 0.0
    %703 = vmatpush2.msra.mxu0 0.0
    %704 = vmatprep.subr.mxu0 0.0
    %705 = vmatpush2.msra.mxu0 0.0
    %706 = vmatprep.subr.mxu0 0.0
    %707 = vmatpush2.msra.mxu0 0.0
    %708 = vmatprep.subr.mxu0 0.0
    %709 = vmatpush2.msra.mxu0 0.0
    %710 = vmatprep.subr.mxu0 0.0
    %711 = vmatpush2.msra.mxu0 0.0
    %712 = vmatprep.subr.mxu0 0.0
    %713 = vmatpush2.msra.mxu0 0.0
    %714 = vmatprep.subr.mxu0 0.0
    %715 = vmatpush2.msra.mxu0 0.0
    %716 = vmatprep.subr.mxu0 0.0
    %717 = vmatpush2.msra.mxu0 0.0
    %718 = vmatprep.mubr.f32.mxu0 0.0
    %719 = vmatmul.mubr.f32.gmra.mxu0 %v588
    %v720 = vpop.f32.mrf.mxu0
    %v721 = vadd.f32 0.0, %v720
    %v722 = vpop.f32.mrf.mxu0
    %723 = vdwg.mxu0
    %v724 = vadd.f32 %v589, %v721
    %vm725 = vcmask 1024
    %726 = vst.msk [vmem:[%s7] sm:$0x3] %vm725, %v724
    // Predicated region
    $region30: #{readout_ml_forward.1} parent=1 // pred_check
      _
    $region31: #{readout_ml_forward.1} parent=1 // pred_check_branch
      %728 = sbr.rel (0) target = $region33
    $region32: #{readout_ml_forward.1} parent=1 // pred_region
      // Predicated region
      $region34: #{readout_ml_forward.1} parent=32 // pred_check
        _
      $region35: #{readout_ml_forward.1} parent=32 // pred_check_branch
        %730 = sbr.rel (0) target = $region37
      $region36: #{readout_ml_forward.1} parent=32 // pred_region
        // Predicated region
        $region38: #{readout_ml_forward.1} parent=36 // pred_check
          _
        $region39: #{readout_ml_forward.1} parent=36 // pred_check_branch
          %732 = sbr.rel (0) target = $region41
        $region40: #{readout_ml_forward.1} parent=36 // pred_region
          // Predicated region
          $region53: #{readout_ml_forward.1} parent=40 // pred_check
            _
          $region54: #{readout_ml_forward.1} parent=40 // pred_check_branch
            %750 = sbr.rel (0) target = $region56
          $region55: #{readout_ml_forward.1} parent=40 // pred_region
            loop: start=0, step=1, limit=1
            $region57: #{readout_ml_forward.1} parent=55 // loop_pre_header
              _
            $region58: #{readout_ml_forward.1} parent=55 // loop_header
              %s752 = sphi 0, %s756
              %p753 = scmp.ge.s32.totalorder %s752, 1
              %s757 = sphi [#allocation2], [#allocation2]
              %s758 = sphi %s6, %s6
            $region59: #{readout_ml_forward.1} parent=55 // loop_header_branch
              %755 = sbr.rel (%p753) target = $region63
            $region60: #{readout_ml_forward.1} parent=55 // loop_body
              %v759 = vld [vmem:[%s757] sm:$0xff]
              %760 = vst [vmem:[%s758] sm:$0xff] %v759
              %v761 = vld [vmem:[%s757 + $0x8] sm:$0xff]
              %762 = vst [vmem:[%s758 + $0x8] sm:$0xff] %v761
            $region61: #{readout_ml_forward.1} parent=55 // loop_footer
              %s756 = sadd.s32 1, %s752
            $region62: #{readout_ml_forward.1} parent=55 // loop_footer_branch
              %751 = sbr.rel target = $region58
            $region63: #{readout_ml_forward.1} parent=55 // loop_exit
              _
          $region56: #{readout_ml_forward.1} parent=40 // pred_fallthru
            _
          // Predicated region
          $region64: #{readout_ml_forward.1} parent=40 // pred_check
            _
          $region65: #{readout_ml_forward.1} parent=40 // pred_check_branch
            %764 = sbr.rel target = $region67
          $region66: #{readout_ml_forward.1} parent=40 // pred_region
            _
          $region67: #{readout_ml_forward.1} parent=40 // pred_fallthru
            _
        $region41: #{readout_ml_forward.1} parent=36 // pred_fallthru
          _
        // Predicated region
        $region42: #{readout_ml_forward.1} parent=36 // pred_check
          _
        $region43: #{readout_ml_forward.1} parent=36 // pred_check_branch
          %734 = sbr.rel target = $region45
        $region44: #{readout_ml_forward.1} parent=36 // pred_region
          %s736 = ssub.s32 256, 1
          loop: start=0, step=1, limit=1
          $region46: #{readout_ml_forward.1} parent=44 // loop_pre_header
            _
          $region47: #{readout_ml_forward.1} parent=44 // loop_header
            %s738 = sphi 0, %s742
            %p739 = scmp.ge.s32.totalorder %s738, 1
            %s743 = sphi [#allocation2], [#allocation2]
            %s744 = sphi %s6, %s6
          $region48: #{readout_ml_forward.1} parent=44 // loop_header_branch
            %741 = sbr.rel (%p739) target = $region52
          $region49: #{readout_ml_forward.1} parent=44 // loop_body
            %v745 = vld [vmem:[%s743] sm:%s736]
            %746 = vst [vmem:[%s744] sm:%s736] %v745
            %v747 = vld [vmem:[%s743 + $0x8] sm:%s736]
            %748 = vst [vmem:[%s744 + $0x8] sm:%s736] %v747
          $region50: #{readout_ml_forward.1} parent=44 // loop_footer
            %s742 = sadd.s32 1, %s738
          $region51: #{readout_ml_forward.1} parent=44 // loop_footer_branch
            %737 = sbr.rel target = $region47
          $region52: #{readout_ml_forward.1} parent=44 // loop_exit
            _
        $region45: #{readout_ml_forward.1} parent=36 // pred_fallthru
          _
      $region37: #{readout_ml_forward.1} parent=32 // pred_fallthru
        _
      %765 = vnop
    $region33: #{readout_ml_forward.1} parent=1 // pred_fallthru
      _
    // Predicated region
    $region68: #{readout_ml_forward.1} parent=1 // pred_check
      _
    $region69: #{readout_ml_forward.1} parent=1 // pred_check_branch
      %767 = sbr.rel (0) target = $region71
    $region70: #{readout_ml_forward.1} parent=1 // pred_region
      _
    $region71: #{readout_ml_forward.1} parent=1 // pred_fallthru
      _
    // Predicated region
    $region72: #{readout_ml_forward.1} parent=1 // pred_check
      _
    $region73: #{readout_ml_forward.1} parent=1 // pred_check_branch
      %769 = sbr.rel (0) target = $region75
    $region74: #{readout_ml_forward.1} parent=1 // pred_region
      _
    $region75: #{readout_ml_forward.1} parent=1 // pred_fallthru
      _
    // Predicated region
    $region76: #{readout_ml_forward.1} parent=1 // pred_check
      _
    $region77: #{readout_ml_forward.1} parent=1 // pred_check_branch
      %771 = sbr.rel (0) target = $region79
    $region78: #{readout_ml_forward.1} parent=1 // pred_region
      _
    $region79: #{readout_ml_forward.1} parent=1 // pred_fallthru
      _

</llo_original>
